<compile_context>
chip_gen: v7x
topology: tpu7x:2x2x1
jax: 0.10.0
libtpu: 0.0.40
codegen_flags: <defaults>
</compile_context>

<pallas_src>
import jax
import jax.numpy as jnp
from jax import lax
from jax.experimental import pallas as pl
from jax.experimental.pallas import tpu as pltpu

# ---- model config (small, consistent with the module: embed % heads == 0) ----
B = 2
T = 8
EMBED = 32            # EMBEDDING_SIZE
HEADS = 8             # Block uses SelfAttention(heads=8)
HEAD_DIM = EMBED // HEADS
HIDDEN = 4 * EMBED    # 128
N = B * T             # 16
QKV_OUT = 2 * HEAD_DIM + EMBED   # [q | k | v_tiled] = 40
LN_EPS = 1e-5


def block_kernel(x_ref, wqkv_ref, w1_ref, w2_ref, small_ref, o_ref):
    x = x_ref[...]                                    # (N, EMBED) f32
    small = small_ref[...]                            # (8, 128) packed params

    b1    = small[0:1, :HIDDEN]                       # (1, HIDDEN)
    b_qkv = small[1:2, :QKV_OUT]                      # (1, QKV_OUT)
    b2    = small[2:3, :EMBED]
    g1    = small[3:4, :EMBED]
    beta1 = small[4:5, :EMBED]
    g2    = small[5:6, :EMBED]
    beta2 = small[6:7, :EMBED]

    # ---- SelfAttention: fused q/k/v projection, value weight pre-tiled ----
    qkv = jnp.dot(x, wqkv_ref[...], preferred_element_type=jnp.float32) + b_qkv
    q = qkv[:, :HEAD_DIM]                             # (N, HEAD_DIM)
    k = qkv[:, HEAD_DIM:2 * HEAD_DIM]                 # (N, HEAD_DIM)
    v = qkv[:, 2 * HEAD_DIM:]                         # (N, EMBED), 8 identical head cols

    # scores: contract last axes directly (no explicit k transpose)
    s = lax.dot_general(q, k, (((1,), (1,)), ((), ())),
                        preferred_element_type=jnp.float32)
    s = s * (1.0 / (EMBED ** 0.5))
    s = s - jnp.max(s, axis=-1, keepdims=True)        # row softmax over B*T
    p = jnp.exp(s)
    att = p * pl.reciprocal(jnp.sum(p, axis=-1, keepdims=True), approx=True)
    y = jnp.dot(att, v, preferred_element_type=jnp.float32)   # (N, EMBED)

    # ---- LayerNorm 1 + residual ----
    mu1 = jnp.mean(y, axis=-1, keepdims=True)
    var1 = jnp.mean((y - mu1) ** 2, axis=-1, keepdims=True)
    x1 = x + (y - mu1) * lax.rsqrt(var1 + LN_EPS) * g1 + beta1

    # ---- FeedForward (dropout = identity at inference) ----
    h = jnp.maximum(
        jnp.dot(x1, w1_ref[...], preferred_element_type=jnp.float32) + b1, 0.0)
    f = jnp.dot(h, w2_ref[...], preferred_element_type=jnp.float32) + b2

    # ---- LayerNorm 2 + residual ----
    mu2 = jnp.mean(f, axis=-1, keepdims=True)
    var2 = jnp.mean((f - mu2) ** 2, axis=-1, keepdims=True)
    o_ref[...] = x1 + (f - mu2) * lax.rsqrt(var2 + LN_EPS) * g2 + beta2


def pack_params(p):
    """Pack 15 small tensors into 4 kernel inputs (done once, outside kernel)."""
    wv_full = jnp.tile(p["wv"], (1, HEADS))                       # (EMBED, EMBED)
    bv_full = jnp.tile(p["bv"], (1, HEADS))                       # (1, EMBED)
    w_qkv = jnp.concatenate([p["wq"], p["wk"], wv_full], axis=1)  # (EMBED, QKV_OUT)
    b_qkv = jnp.concatenate([p["bq"], p["bk"], bv_full], axis=1)  # (1, QKV_OUT)

    small = jnp.zeros((8, 128), jnp.float32)
    small = small.at[0, :HIDDEN].set(p["b1"][0])
    small = small.at[1, :QKV_OUT].set(b_qkv[0])
    small = small.at[2, :EMBED].set(p["b2"][0])
    small = small.at[3, :EMBED].set(p["g1"][0])
    small = small.at[4, :EMBED].set(p["beta1"][0])
    small = small.at[5, :EMBED].set(p["g2"][0])
    small = small.at[6, :EMBED].set(p["beta2"][0])
    return w_qkv, p["w1"], p["w2"], small


def block_forward(x_btc, params):
    x = x_btc.reshape(N, EMBED).astype(jnp.float32)
    w_qkv, w1, w2, small = pack_params(params)
    args = (x, w_qkv, w1, w2, small)
    vmem = pl.BlockSpec(memory_space=pltpu.MemorySpace.VMEM)  # whole array in VMEM
    out = pl.pallas_call(
        block_kernel,
        out_shape=jax.ShapeDtypeStruct((N, EMBED), jnp.float32),
        in_specs=[vmem] * len(args),
        out_specs=vmem,
    )(*args)
    return out.reshape(B, T, EMBED)


def reference_forward(x_btc, p):
    """Pure-JAX f32 reference mirroring the PyTorch semantics."""
    x = x_btc.reshape(N, EMBED)
    q = x @ p["wq"] + p["bq"]
    k = x @ p["wk"] + p["bk"]
    v = x @ p["wv"] + p["bv"]
    att = jax.nn.softmax((q @ k.T) / (EMBED ** 0.5), axis=-1)
    y_head = att @ v
    y = jnp.concatenate([y_head] * HEADS, axis=-1)

    def ln(z, g, b):
        mu = jnp.mean(z, -1, keepdims=True)
        var = jnp.mean((z - mu) ** 2, -1, keepdims=True)
        return (z - mu) / jnp.sqrt(var + LN_EPS) * g + b

    x1 = x + ln(y, p["g1"], p["beta1"])
    h = jnp.maximum(x1 @ p["w1"] + p["b1"], 0.0)
    f = h @ p["w2"] + p["b2"]
    out = x1 + ln(f, p["g2"], p["beta2"])
    return out.reshape(B, T, EMBED)


def init_params(key):
    ks = jax.random.split(key, 6)
    std = 0.02
    return {
        # q/k/v projections: (in=EMBED, out=HEAD_DIM); biases zero (deterministic)
        "wq": jax.random.normal(ks[0], (EMBED, HEAD_DIM), jnp.float32) * std,
        "bq": jnp.zeros((1, HEAD_DIM), jnp.float32),
        "wk": jax.random.normal(ks[1], (EMBED, HEAD_DIM), jnp.float32) * std,
        "bk": jnp.zeros((1, HEAD_DIM), jnp.float32),
        "wv": jax.random.normal(ks[2], (EMBED, HEAD_DIM), jnp.float32) * std,
        "bv": jnp.zeros((1, HEAD_DIM), jnp.float32),
        # FeedForward
        "w1": jax.random.normal(ks[3], (EMBED, HIDDEN), jnp.float32) * std,
        "b1": jnp.zeros((1, HIDDEN), jnp.float32),
        "w2": jax.random.normal(ks[4], (HIDDEN, EMBED), jnp.float32) * std,
        "b2": jnp.zeros((1, EMBED), jnp.float32),
        # LayerNorms (PyTorch defaults: weight=1, bias=0)
        "g1": jnp.ones((1, EMBED), jnp.float32),
        "beta1": jnp.zeros((1, EMBED), jnp.float32),
        "g2": jnp.ones((1, EMBED), jnp.float32),
        "beta2": jnp.zeros((1, EMBED), jnp.float32),
    }


if __name__ == "__main__":
    key = jax.random.PRNGKey(0)
    k_x, k_p = jax.random.split(key)
    x = jax.random.normal(k_x, (B, T, EMBED), jnp.float32)
    params = init_params(k_p)

    out = block_forward(x, params)
    out = jax.block_until_ready(out)

    ref = reference_forward(x, params)
    assert out.shape == (B, T, EMBED)
    assert jnp.allclose(out, ref, atol=1e-4, rtol=1e-4), "mismatch vs JAX reference"

    print("KERNEL_OK")
</pallas_src>

<mosaic_0001>
module attributes {stable_mosaic.version = 11 : i64} {
  func.func @block_kernel(%arg0: memref<16x32xf32, #tpu.memory_space<vmem>>, %arg1: memref<32x40xf32, #tpu.memory_space<vmem>>, %arg2: memref<32x128xf32, #tpu.memory_space<vmem>>, %arg3: memref<128x32xf32, #tpu.memory_space<vmem>>, %arg4: memref<8x128xf32, #tpu.memory_space<vmem>>, %arg5: memref<16x32xf32, #tpu.memory_space<vmem>>) attributes {dimension_semantics = [], scalar_prefetch = 0 : i64, scratch_operands = 0 : i64, tpu.core_type = #tpu.core_type<tc>} {
    %c0 = arith.constant 0 : index
    %c0_0 = arith.constant 0 : index
    %0 = vector.load %arg0[%c0, %c0_0] : memref<16x32xf32, #tpu.memory_space<vmem>>, vector<16x32xf32>
    %c0_1 = arith.constant 0 : index
    %c0_2 = arith.constant 0 : index
    %1 = vector.load %arg4[%c0_1, %c0_2] : memref<8x128xf32, #tpu.memory_space<vmem>>, vector<8x128xf32>
    %2 = vector.extract_strided_slice %1 {offsets = [0, 0], sizes = [1, 128], strides = [1, 1]} : vector<8x128xf32> to vector<1x128xf32>
    %3 = vector.extract_strided_slice %1 {offsets = [1, 0], sizes = [1, 40], strides = [1, 1]} : vector<8x128xf32> to vector<1x40xf32>
    %4 = vector.extract_strided_slice %1 {offsets = [2, 0], sizes = [1, 32], strides = [1, 1]} : vector<8x128xf32> to vector<1x32xf32>
    %5 = vector.extract_strided_slice %1 {offsets = [3, 0], sizes = [1, 32], strides = [1, 1]} : vector<8x128xf32> to vector<1x32xf32>
    %6 = vector.extract_strided_slice %1 {offsets = [4, 0], sizes = [1, 32], strides = [1, 1]} : vector<8x128xf32> to vector<1x32xf32>
    %7 = vector.extract_strided_slice %1 {offsets = [5, 0], sizes = [1, 32], strides = [1, 1]} : vector<8x128xf32> to vector<1x32xf32>
    %8 = vector.extract_strided_slice %1 {offsets = [6, 0], sizes = [1, 32], strides = [1, 1]} : vector<8x128xf32> to vector<1x32xf32>
    %c0_3 = arith.constant 0 : index
    %c0_4 = arith.constant 0 : index
    %9 = vector.load %arg1[%c0_3, %c0_4] : memref<32x40xf32, #tpu.memory_space<vmem>>, vector<32x40xf32>
    %cst = arith.constant dense<0.000000e+00> : vector<16x40xf32>
    %10 = tpu.matmul %0, %9, %cst {dimension_numbers = #tpu.dot_dimension_numbers<[1], [0], [0], [1], [0, 0, 1, 1], [], []>} : vector<16x32xf32>, vector<32x40xf32>, vector<16x40xf32> -> vector<16x40xf32>
    %11 = vector.broadcast %3 : vector<1x40xf32> to vector<16x40xf32>
    %12 = arith.addf %10, %11 : vector<16x40xf32>
    %13 = vector.extract_strided_slice %12 {offsets = [0, 0], sizes = [16, 4], strides = [1, 1]} : vector<16x40xf32> to vector<16x4xf32>
    %14 = vector.extract_strided_slice %12 {offsets = [0, 4], sizes = [16, 4], strides = [1, 1]} : vector<16x40xf32> to vector<16x4xf32>
    %15 = vector.extract_strided_slice %12 {offsets = [0, 8], sizes = [16, 32], strides = [1, 1]} : vector<16x40xf32> to vector<16x32xf32>
    %cst_5 = arith.constant dense<0.000000e+00> : vector<16x16xf32>
    %16 = tpu.matmul %13, %14, %cst_5 {dimension_numbers = #tpu.dot_dimension_numbers<[1], [1], [0], [0], [0, 0, 1, 0], [], []>} : vector<16x4xf32>, vector<16x4xf32>, vector<16x16xf32> -> vector<16x16xf32>
    %cst_6 = arith.constant 0.176776692 : f32
    %17 = vector.broadcast %cst_6 : f32 to vector<16x16xf32>
    %18 = arith.mulf %16, %17 : vector<16x16xf32>
    %cst_7 = arith.constant dense<0xFF800000> : vector<16xf32>
    %19 = vector.multi_reduction <maximumf>, %18, %cst_7 [1] : vector<16x16xf32> to vector<16xf32>
    %20 = vector.shape_cast %19 : vector<16xf32> to vector<16x1xf32>
    %21 = vector.broadcast %20 : vector<16x1xf32> to vector<16x16xf32>
    %22 = arith.subf %18, %21 : vector<16x16xf32>
    %23 = math.exp %22 : vector<16x16xf32>
    %cst_8 = arith.constant dense<0.000000e+00> : vector<16xf32>
    %24 = vector.multi_reduction <add>, %23, %cst_8 [1] : vector<16x16xf32> to vector<16xf32>
    %25 = vector.shape_cast %24 : vector<16xf32> to vector<16x1xf32>
    %26 = tpu.reciprocal %25 {approx = true} : vector<16x1xf32> -> vector<16x1xf32>
    %27 = vector.broadcast %26 : vector<16x1xf32> to vector<16x16xf32>
    %28 = arith.mulf %23, %27 : vector<16x16xf32>
    %cst_9 = arith.constant dense<0.000000e+00> : vector<16x32xf32>
    %29 = tpu.matmul %28, %15, %cst_9 {dimension_numbers = #tpu.dot_dimension_numbers<[1], [0], [0], [1], [0, 0, 1, 1], [], []>} : vector<16x16xf32>, vector<16x32xf32>, vector<16x32xf32> -> vector<16x32xf32>
    %cst_10 = arith.constant dense<0.000000e+00> : vector<16xf32>
    %30 = vector.multi_reduction <add>, %29, %cst_10 [1] : vector<16x32xf32> to vector<16xf32>
    %31 = vector.shape_cast %30 : vector<16xf32> to vector<16x1xf32>
    %cst_11 = arith.constant 3.200000e+01 : f32
    %32 = vector.broadcast %cst_11 : f32 to vector<16x1xf32>
    %33 = arith.divf %31, %32 : vector<16x1xf32>
    %34 = vector.broadcast %33 : vector<16x1xf32> to vector<16x32xf32>
    %35 = arith.subf %29, %34 : vector<16x32xf32>
    %36 = arith.mulf %35, %35 : vector<16x32xf32>
    %cst_12 = arith.constant dense<0.000000e+00> : vector<16xf32>
    %37 = vector.multi_reduction <add>, %36, %cst_12 [1] : vector<16x32xf32> to vector<16xf32>
    %38 = vector.shape_cast %37 : vector<16xf32> to vector<16x1xf32>
    %cst_13 = arith.constant 3.200000e+01 : f32
    %39 = vector.broadcast %cst_13 : f32 to vector<16x1xf32>
    %40 = arith.divf %38, %39 : vector<16x1xf32>
    %41 = vector.broadcast %33 : vector<16x1xf32> to vector<16x32xf32>
    %42 = arith.subf %29, %41 : vector<16x32xf32>
    %cst_14 = arith.constant 9.99999974E-6 : f32
    %43 = vector.broadcast %cst_14 : f32 to vector<16x1xf32>
    %44 = arith.addf %40, %43 : vector<16x1xf32>
    %45 = math.rsqrt %44 : vector<16x1xf32>
    %46 = vector.broadcast %45 : vector<16x1xf32> to vector<16x32xf32>
    %47 = arith.mulf %42, %46 : vector<16x32xf32>
    %48 = vector.broadcast %5 : vector<1x32xf32> to vector<16x32xf32>
    %49 = arith.mulf %47, %48 : vector<16x32xf32>
    %50 = arith.addf %0, %49 : vector<16x32xf32>
    %51 = vector.broadcast %6 : vector<1x32xf32> to vector<16x32xf32>
    %52 = arith.addf %50, %51 : vector<16x32xf32>
    %c0_15 = arith.constant 0 : index
    %c0_16 = arith.constant 0 : index
    %53 = vector.load %arg2[%c0_15, %c0_16] : memref<32x128xf32, #tpu.memory_space<vmem>>, vector<32x128xf32>
    %cst_17 = arith.constant dense<0.000000e+00> : vector<16x128xf32>
    %54 = tpu.matmul %52, %53, %cst_17 {dimension_numbers = #tpu.dot_dimension_numbers<[1], [0], [0], [1], [0, 0, 1, 1], [], []>} : vector<16x32xf32>, vector<32x128xf32>, vector<16x128xf32> -> vector<16x128xf32>
    %55 = vector.broadcast %2 : vector<1x128xf32> to vector<16x128xf32>
    %56 = arith.addf %54, %55 : vector<16x128xf32>
    %cst_18 = arith.constant 0.000000e+00 : f32
    %57 = vector.broadcast %cst_18 : f32 to vector<16x128xf32>
    %58 = arith.maximumf %56, %57 : vector<16x128xf32>
    %c0_19 = arith.constant 0 : index
    %c0_20 = arith.constant 0 : index
    %59 = vector.load %arg3[%c0_19, %c0_20] : memref<128x32xf32, #tpu.memory_space<vmem>>, vector<128x32xf32>
    %cst_21 = arith.constant dense<0.000000e+00> : vector<16x32xf32>
    %60 = tpu.matmul %58, %59, %cst_21 {dimension_numbers = #tpu.dot_dimension_numbers<[1], [0], [0], [1], [0, 0, 1, 1], [], []>} : vector<16x128xf32>, vector<128x32xf32>, vector<16x32xf32> -> vector<16x32xf32>
    %61 = vector.broadcast %4 : vector<1x32xf32> to vector<16x32xf32>
    %62 = arith.addf %60, %61 : vector<16x32xf32>
    %cst_22 = arith.constant dense<0.000000e+00> : vector<16xf32>
    %63 = vector.multi_reduction <add>, %62, %cst_22 [1] : vector<16x32xf32> to vector<16xf32>
    %64 = vector.shape_cast %63 : vector<16xf32> to vector<16x1xf32>
    %cst_23 = arith.constant 3.200000e+01 : f32
    %65 = vector.broadcast %cst_23 : f32 to vector<16x1xf32>
    %66 = arith.divf %64, %65 : vector<16x1xf32>
    %67 = vector.broadcast %66 : vector<16x1xf32> to vector<16x32xf32>
    %68 = arith.subf %62, %67 : vector<16x32xf32>
    %69 = arith.mulf %68, %68 : vector<16x32xf32>
    %cst_24 = arith.constant dense<0.000000e+00> : vector<16xf32>
    %70 = vector.multi_reduction <add>, %69, %cst_24 [1] : vector<16x32xf32> to vector<16xf32>
    %71 = vector.shape_cast %70 : vector<16xf32> to vector<16x1xf32>
    %cst_25 = arith.constant 3.200000e+01 : f32
    %72 = vector.broadcast %cst_25 : f32 to vector<16x1xf32>
    %73 = arith.divf %71, %72 : vector<16x1xf32>
    %74 = vector.broadcast %66 : vector<16x1xf32> to vector<16x32xf32>
    %75 = arith.subf %62, %74 : vector<16x32xf32>
    %cst_26 = arith.constant 9.99999974E-6 : f32
    %76 = vector.broadcast %cst_26 : f32 to vector<16x1xf32>
    %77 = arith.addf %73, %76 : vector<16x1xf32>
    %78 = math.rsqrt %77 : vector<16x1xf32>
    %79 = vector.broadcast %78 : vector<16x1xf32> to vector<16x32xf32>
    %80 = arith.mulf %75, %79 : vector<16x32xf32>
    %81 = vector.broadcast %7 : vector<1x32xf32> to vector<16x32xf32>
    %82 = arith.mulf %80, %81 : vector<16x32xf32>
    %83 = arith.addf %52, %82 : vector<16x32xf32>
    %84 = vector.broadcast %8 : vector<1x32xf32> to vector<16x32xf32>
    %85 = arith.addf %83, %84 : vector<16x32xf32>
    %c0_27 = arith.constant 0 : index
    %c0_28 = arith.constant 0 : index
    %86 = vector.load %arg5[%c0_27, %c0_28] : memref<16x32xf32, #tpu.memory_space<vmem>>, vector<16x32xf32>
    tpu.vector_store %arg5[%c0_27, %c0_28], %85 {strides = array<i32>} : memref<16x32xf32, #tpu.memory_space<vmem>>, vector<16x32xf32>,
    return
  }
}

</mosaic_0001>

<llo_original>
// kernel: tpu_custom_call.1
$region0: #{tpu_custom_call.1}
  #allocation0 [shape = 'u32[]', space=smem, size = 0x4, offset = 0x4, fixed_abs, tag = 'smem constant byte address 0x4 - core index']
  #allocation1 [shape = 'u32[144,128]{1,0:T(1,128)}', space=vmem, size = 0x12000, scoped, tag = 'internal scratch']
  %s0 = inlined_call_operand.vmem [shape: f32[16,32], index: 0, kind: input, shape index: {}]
  %s1 = inlined_call_operand.vmem [shape: f32[32,40], index: 1, kind: input, shape index: {}]
  %s2 = inlined_call_operand.vmem [shape: f32[32,128], index: 2, kind: input, shape index: {}]
  %s3 = inlined_call_operand.vmem [shape: f32[128,32], index: 3, kind: input, shape index: {}]
  %s4 = inlined_call_operand.vmem [shape: f32[8,128], index: 4, kind: input, shape index: {}]
  %s5 = inlined_call_operand.hbm [shape: f32[16,32], index: 5, kind: output, shape index: {}]
  %s6 = sld [smem:[#allocation0]]
  $region30: #{tpu_custom_call.1} parent=0
    _
  %s8 = ssub.s32 1, %s6
  %s9 = scalar_select 0, %s8, %s6
  $region1: #{tpu_custom_call.1} parent=0
    #allocation2 [shape = 'u8[8192]{0}', space=vmem, size = 0x2000, scoped, tag = 'output window, operand 0, single buffered']
    #allocation3 [shape = 's32[1]{0}', space=sflag, size = 0x4, scoped, tag = 'scoped memory for tpu_custom_call.1']
    %10 = vsyncpa [#allocation3], 0
    // Predicated region
    $region2: #{tpu_custom_call.1} parent=1 // pred_check
      _
    $region3: #{tpu_custom_call.1} parent=1 // pred_check_branch
      %12 = sbr.rel (0) target = $region5
    $region4: #{tpu_custom_call.1} parent=1 // pred_region
      _
    $region5: #{tpu_custom_call.1} parent=1 // pred_fallthru
      _
    // Predicated region
    $region6: #{tpu_custom_call.1} parent=1 // pred_check
      _
    $region7: #{tpu_custom_call.1} parent=1 // pred_check_branch
      %14 = sbr.rel (0) target = $region9
    $region8: #{tpu_custom_call.1} parent=1 // pred_region
      _
    $region9: #{tpu_custom_call.1} parent=1 // pred_fallthru
      _
    // Predicated region
    $region10: #{tpu_custom_call.1} parent=1 // pred_check
      _
    $region11: #{tpu_custom_call.1} parent=1 // pred_check_branch
      %16 = sbr.rel (0) target = $region13
    $region12: #{tpu_custom_call.1} parent=1 // pred_region
      _
    $region13: #{tpu_custom_call.1} parent=1 // pred_fallthru
      _
    // Predicated region
    $region14: #{tpu_custom_call.1} parent=1 // pred_check
      _
    $region15: #{tpu_custom_call.1} parent=1 // pred_check_branch
      %18 = sbr.rel (0) target = $region17
    $region16: #{tpu_custom_call.1} parent=1 // pred_region
      _
    $region17: #{tpu_custom_call.1} parent=1 // pred_fallthru
      _
    // Predicated region
    $region18: #{tpu_custom_call.1} parent=1 // pred_check
      _
    $region19: #{tpu_custom_call.1} parent=1 // pred_check_branch
      %20 = sbr.rel (0) target = $region21
    $region20: #{tpu_custom_call.1} parent=1 // pred_region
      _
    $region21: #{tpu_custom_call.1} parent=1 // pred_fallthru
      _
    %v21 = vld [vmem:[%s0] sm:$0xff]
    %v22 = vld [vmem:[%s0 + $0x8] sm:$0xff]
    %v23 = vld [vmem:[%s4] sm:$0xff]
    %v24 = vld [vmem:[%s1] sm:$0xff]
    %v25 = vld [vmem:[%s1 + $0x8] sm:$0xff]
    %v26 = vld [vmem:[%s1 + $0x10] sm:$0xff]
    %v27 = vld [vmem:[%s1 + $0x18] sm:$0xff]
    %v28 = vlaneseq
    %v29 = vshrl.u32 %v28, 7
    %v30 = vsub.s32 1, %v29
    %v31 = vrot.slane %v23, %v30
    %vm32 = vcmask 261120
    %v34 = vsel %vm32, %v21, 0
    %v37 = vsel %vm32, %v22, 0
    %39 = vmatprep.subr.mxu0 0.0
    %40 = vmatpush1.msra.mxu0 %v24
    %41 = vmatprep.subr.mxu0 0.0
    %42 = vmatpush1.msra.mxu0 %v25
    %43 = vmatprep.subr.mxu0 0.0
    %44 = vmatpush1.msra.mxu0 %v26
    %45 = vmatprep.subr.mxu0 0.0
    %46 = vmatpush1.msra.mxu0 %v27
    %47 = vmatprep.subr.mxu0 0.0
    %48 = vmatpush1.msra.mxu0 0.0
    %49 = vmatprep.subr.mxu0 0.0
    %50 = vmatpush1.msra.mxu0 0.0
    %51 = vmatprep.subr.mxu0 0.0
    %52 = vmatpush1.msra.mxu0 0.0
    %53 = vmatprep.subr.mxu0 0.0
    %54 = vmatpush1.msra.mxu0 0.0
    %55 = vmatprep.subr.mxu0 0.0
    %56 = vmatpush1.msra.mxu0 0.0
    %57 = vmatprep.subr.mxu0 0.0
    %58 = vmatpush1.msra.mxu0 0.0
    %59 = vmatprep.subr.mxu0 0.0
    %60 = vmatpush1.msra.mxu0 0.0
    %61 = vmatprep.subr.mxu0 0.0
    %62 = vmatpush1.msra.mxu0 0.0
    %63 = vmatprep.subr.mxu0 0.0
    %64 = vmatpush1.msra.mxu0 0.0
    %65 = vmatprep.subr.mxu0 0.0
    %66 = vmatpush1.msra.mxu0 0.0
    %67 = vmatprep.subr.mxu0 0.0
    %68 = vmatpush1.msra.mxu0 0.0
    %69 = vmatprep.subr.mxu0 0.0
    %70 = vmatpush1.msra.mxu0 0.0
    %71 = vmatprep.subr.mxu0 0.0
    %72 = vmatpush1.msra.mxu0 0.0
    %73 = vmatprep.subr.mxu0 0.0
    %74 = vmatpush1.msra.mxu0 0.0
    %75 = vmatprep.subr.mxu0 0.0
    %76 = vmatpush1.msra.mxu0 0.0
    %77 = vmatprep.subr.mxu0 0.0
    %78 = vmatpush1.msra.mxu0 0.0
    %79 = vmatprep.subr.mxu0 0.0
    %80 = vmatpush1.msra.mxu0 0.0
    %81 = vmatprep.subr.mxu0 0.0
    %82 = vmatpush1.msra.mxu0 0.0
    %83 = vmatprep.subr.mxu0 0.0
    %84 = vmatpush1.msra.mxu0 0.0
    %85 = vmatprep.subr.mxu0 0.0
    %86 = vmatpush1.msra.mxu0 0.0
    %87 = vmatprep.subr.mxu0 0.0
    %88 = vmatpush1.msra.mxu0 0.0
    %89 = vmatprep.subr.mxu0 0.0
    %90 = vmatpush1.msra.mxu0 0.0
    %91 = vmatprep.subr.mxu0 0.0
    %92 = vmatpush1.msra.mxu0 0.0
    %93 = vmatprep.subr.mxu0 0.0
    %94 = vmatpush1.msra.mxu0 0.0
    %95 = vmatprep.subr.mxu0 0.0
    %96 = vmatpush1.msra.mxu0 0.0
    %97 = vmatprep.subr.mxu0 0.0
    %98 = vmatpush1.msra.mxu0 0.0
    %99 = vmatprep.subr.mxu0 0.0
    %100 = vmatpush1.msra.mxu0 0.0
    %101 = vmatprep.subr.mxu0 0.0
    %102 = vmatpush1.msra.mxu0 0.0
    %103 = vmatprep.mubr.f32.mxu0 0.0
    %104 = vmatmul.mubr.f32.gmra.mrb[0].mxu0 %v34
    %v105 = vpop.f32.mrb[0].mxu0
    %v106 = vadd.f32 %v31, %v105
    %v107 = vpop.f32.mrb[0].mxu0
    %108 = vmatprep.mubr.f32.mxu0 0.0
    %109 = vmatmul.mubr.f32.gmra.mrb[0].mxu0 %v37
    %v110 = vpop.f32.mrb[0].mxu0
    %v111 = vadd.f32 %v31, %v110
    %v112 = vpop.f32.mrb[0].mxu0
    %113 = vdwg.mxu0
    %116 = vrot.lane.b32.xlu0 %v106, 124
    %v117 = vpop.permute.xlu0 %116
    %118 = vrot.lane.b32.xlu0 %v111, 124
    %v119 = vpop.permute.xlu0 %118
    %vm120 = vcmask 31744
    %v121 = vsel %vm120, %v106, 0
    %v123 = vsel %vm120, %v111, 0
    %v125 = vsel %vm120, %v117, 0
    %v127 = vsel %vm120, %v119, 0
    %129 = vmatprep.subr.mxu0 0.0
    %130 = vmatpush1.xpose.msra.mxu0 %v125
    %131 = vmatprep.subr.mxu0 0.0
    %132 = vmatpush1.xpose.msra.mxu0 %v127
    %133 = vmatprep.subr.mxu0 0.0
    %134 = vmatpush1.xpose.msra.mxu0 0.0
    %135 = vmatprep.subr.mxu0 0.0
    %136 = vmatpush1.xpose.msra.mxu0 0.0
    %137 = vmatprep.subr.mxu0 0.0
    %138 = vmatpush1.xpose.msra.mxu0 0.0
    %139 = vmatprep.subr.mxu0 0.0
    %140 = vmatpush1.xpose.msra.mxu0 0.0
    %141 = vmatprep.subr.mxu0 0.0
    %142 = vmatpush1.xpose.msra.mxu0 0.0
    %143 = vmatprep.subr.mxu0 0.0
    %144 = vmatpush1.xpose.msra.mxu0 0.0
    %145 = vmatprep.subr.mxu0 0.0
    %146 = vmatpush1.xpose.msra.mxu0 0.0
    %147 = vmatprep.subr.mxu0 0.0
    %148 = vmatpush1.xpose.msra.mxu0 0.0
    %149 = vmatprep.subr.mxu0 0.0
    %150 = vmatpush1.xpose.msra.mxu0 0.0
    %151 = vmatprep.subr.mxu0 0.0
    %152 = vmatpush1.xpose.msra.mxu0 0.0
    %153 = vmatprep.subr.mxu0 0.0
    %154 = vmatpush1.xpose.msra.mxu0 0.0
    %155 = vmatprep.subr.mxu0 0.0
    %156 = vmatpush1.xpose.msra.mxu0 0.0
    %157 = vmatprep.subr.mxu0 0.0
    %158 = vmatpush1.xpose.msra.mxu0 0.0
    %159 = vmatprep.subr.mxu0 0.0
    %160 = vmatpush1.xpose.msra.mxu0 0.0
    %161 = vmatprep.subr.mxu0 0.0
    %162 = vmatpush1.xpose.msra.mxu0 0.0
    %163 = vmatprep.subr.mxu0 0.0
    %164 = vmatpush1.xpose.msra.mxu0 0.0
    %165 = vmatprep.subr.mxu0 0.0
    %166 = vmatpush1.xpose.msra.mxu0 0.0
    %167 = vmatprep.subr.mxu0 0.0
    %168 = vmatpush1.xpose.msra.mxu0 0.0
    %169 = vmatprep.subr.mxu0 0.0
    %170 = vmatpush1.xpose.msra.mxu0 0.0
    %171 = vmatprep.subr.mxu0 0.0
    %172 = vmatpush1.xpose.msra.mxu0 0.0
    %173 = vmatprep.subr.mxu0 0.0
    %174 = vmatpush1.xpose.msra.mxu0 0.0
    %175 = vmatprep.subr.mxu0 0.0
    %176 = vmatpush1.xpose.msra.mxu0 0.0
    %177 = vmatprep.subr.mxu0 0.0
    %178 = vmatpush1.xpose.msra.mxu0 0.0
    %179 = vmatprep.subr.mxu0 0.0
    %180 = vmatpush1.xpose.msra.mxu0 0.0
    %181 = vmatprep.subr.mxu0 0.0
    %182 = vmatpush1.xpose.msra.mxu0 0.0
    %183 = vmatprep.subr.mxu0 0.0
    %184 = vmatpush1.xpose.msra.mxu0 0.0
    %185 = vmatprep.subr.mxu0 0.0
    %186 = vmatpush1.xpose.msra.mxu0 0.0
    %187 = vmatprep.subr.mxu0 0.0
    %188 = vmatpush1.xpose.msra.mxu0 0.0
    %189 = vmatprep.subr.mxu0 0.0
    %190 = vmatpush1.xpose.msra.mxu0 0.0
    %191 = vmatprep.subr.mxu0 0.0
    %192 = vmatpush1.xpose.msra.mxu0 0.0
    %193 = vmatprep.mubr.f32.mxu0 0.0
    %194 = vmatmul.mubr.f32.gmra.mrb[0].mxu0 %v121
    %v195 = vpop.f32.mrb[0].mxu0
    %v196 = vadd.f32 0.0, %v195
    %v197 = vpop.f32.mrb[0].mxu0
    %198 = vmatprep.mubr.f32.mxu0 0.0
    %199 = vmatmul.mubr.f32.gmra.mrb[0].mxu0 %v123
    %v200 = vpop.f32.mrb[0].mxu0
    %v201 = vadd.f32 0.0, %v200
    %v202 = vpop.f32.mrb[0].mxu0
    %203 = vdwg.mxu0
    %v204 = vmul.f32 %v196, 0.17677669
    %v205 = vmul.f32 %v201, 0.17677669
    %vm206 = vcmask 130048
    %v207 = vsel %vm206, %v204, -inf
    %208 = vmax.xlane.f32.xlu0 %v207
    %v209 = vpop.xlane.xlu0 %208
    %v210 = vsel %vm206, %v205, -inf
    %211 = vmax.xlane.f32.xlu0 %v210
    %v212 = vpop.xlane.xlu0 %211
    %v213 = vsub.f32 %v204, %v209
    %v214 = vsub.f32 %v205, %v212
    %v215 = vmul.f32 %v213, 1.442695
    %v216 = vpow.pop %v215
    %v217 = vmul.f32 %v214, 1.442695
    %v218 = vpow.pop %v217
    %v219 = vsel %vm206, %v216, 0.0
    %220 = vadd.xlane.f32.xlu0 %v219
    %v221 = vpop.xlane.xlu0 %220
    %v222 = vsel %vm206, %v218, 0.0
    %223 = vadd.xlane.f32.xlu0 %v222
    %v224 = vpop.xlane.xlu0 %223
    %v225 = vrcp.pop %v221
    %v226 = vrcp.pop %v224
    %v227 = vmul.f32 %v216, %v225
    %v228 = vmul.f32 %v218, %v226
    %229 = vrot.lane.b32.xlu0 %v106, 120
    %v230 = vpop.permute.xlu0 %229
    %231 = vrot.lane.b32.xlu0 %v111, 120
    %v232 = vpop.permute.xlu0 %231
    %v236 = vsel %vm206, %v227, 0
    %v239 = vsel %vm206, %v228, 0
    %241 = vmatprep.subr.mxu0 0.0
    %242 = vmatpush1.msra.mxu0 %v230
    %243 = vmatprep.subr.mxu0 0.0
    %244 = vmatpush1.msra.mxu0 %v232
    %245 = vmatprep.subr.mxu0 0.0
    %246 = vmatpush1.msra.mxu0 0.0
    %247 = vmatprep.subr.mxu0 0.0
    %248 = vmatpush1.msra.mxu0 0.0
    %249 = vmatprep.subr.mxu0 0.0
    %250 = vmatpush1.msra.mxu0 0.0
    %251 = vmatprep.subr.mxu0 0.0
    %252 = vmatpush1.msra.mxu0 0.0
    %253 = vmatprep.subr.mxu0 0.0
    %254 = vmatpush1.msra.mxu0 0.0
    %255 = vmatprep.subr.mxu0 0.0
    %256 = vmatpush1.msra.mxu0 0.0
    %257 = vmatprep.subr.mxu0 0.0
    %258 = vmatpush1.msra.mxu0 0.0
    %259 = vmatprep.subr.mxu0 0.0
    %260 = vmatpush1.msra.mxu0 0.0
    %261 = vmatprep.subr.mxu0 0.0
    %262 = vmatpush1.msra.mxu0 0.0
    %263 = vmatprep.subr.mxu0 0.0
    %264 = vmatpush1.msra.mxu0 0.0
    %265 = vmatprep.subr.mxu0 0.0
    %266 = vmatpush1.msra.mxu0 0.0
    %267 = vmatprep.subr.mxu0 0.0
    %268 = vmatpush1.msra.mxu0 0.0
    %269 = vmatprep.subr.mxu0 0.0
    %270 = vmatpush1.msra.mxu0 0.0
    %271 = vmatprep.subr.mxu0 0.0
    %272 = vmatpush1.msra.mxu0 0.0
    %273 = vmatprep.subr.mxu0 0.0
    %274 = vmatpush1.msra.mxu0 0.0
    %275 = vmatprep.subr.mxu0 0.0
    %276 = vmatpush1.msra.mxu0 0.0
    %277 = vmatprep.subr.mxu0 0.0
    %278 = vmatpush1.msra.mxu0 0.0
    %279 = vmatprep.subr.mxu0 0.0
    %280 = vmatpush1.msra.mxu0 0.0
    %281 = vmatprep.subr.mxu0 0.0
    %282 = vmatpush1.msra.mxu0 0.0
    %283 = vmatprep.subr.mxu0 0.0
    %284 = vmatpush1.msra.mxu0 0.0
    %285 = vmatprep.subr.mxu0 0.0
    %286 = vmatpush1.msra.mxu0 0.0
    %287 = vmatprep.subr.mxu0 0.0
    %288 = vmatpush1.msra.mxu0 0.0
    %289 = vmatprep.subr.mxu0 0.0
    %290 = vmatpush1.msra.mxu0 0.0
    %291 = vmatprep.subr.mxu0 0.0
    %292 = vmatpush1.msra.mxu0 0.0
    %293 = vmatprep.subr.mxu0 0.0
    %294 = vmatpush1.msra.mxu0 0.0
    %295 = vmatprep.subr.mxu0 0.0
    %296 = vmatpush1.msra.mxu0 0.0
    %297 = vmatprep.subr.mxu0 0.0
    %298 = vmatpush1.msra.mxu0 0.0
    %299 = vmatprep.subr.mxu0 0.0
    %300 = vmatpush1.msra.mxu0 0.0
    %301 = vmatprep.subr.mxu0 0.0
    %302 = vmatpush1.msra.mxu0 0.0
    %303 = vmatprep.subr.mxu0 0.0
    %304 = vmatpush1.msra.mxu0 0.0
    %305 = vmatprep.mubr.f32.mxu0 0.0
    %306 = vmatmul.mubr.f32.gmra.mrb[0].mxu0 %v236
    %v307 = vpop.f32.mrb[0].mxu0
    %v308 = vadd.f32 0.0, %v307
    %v309 = vpop.f32.mrb[0].mxu0
    %310 = vmatprep.mubr.f32.mxu0 0.0
    %311 = vmatmul.mubr.f32.gmra.mrb[0].mxu0 %v239
    %v312 = vpop.f32.mrb[0].mxu0
    %v313 = vadd.f32 0.0, %v312
    %v314 = vpop.f32.mrb[0].mxu0
    %315 = vdwg.mxu0
    %v316 = vsel %vm32, %v308, 0.0
    %317 = vadd.xlane.f32.xlu0 %v316
    %v318 = vpop.xlane.xlu0 %317
    %v319 = vsel %vm32, %v313, 0.0
    %320 = vadd.xlane.f32.xlu0 %v319
    %v321 = vpop.xlane.xlu0 %320
    %v322 = vrcp.pop 32.0
    %v323 = vmul.f32 %v318, %v322
    %v324 = vmul.f32 %v321, %v322
    %v325 = vsub.f32 %v308, %v323
    %v326 = vsub.f32 %v313, %v324
    %v327 = vmul.f32 %v325, %v325
    %v328 = vmul.f32 %v326, %v326
    %v329 = vsel %vm32, %v327, 0.0
    %330 = vadd.xlane.f32.xlu0 %v329
    %v331 = vpop.xlane.xlu0 %330
    %v332 = vsel %vm32, %v328, 0.0
    %333 = vadd.xlane.f32.xlu0 %v332
    %v334 = vpop.xlane.xlu0 %333
    %v335 = vmul.f32 %v331, %v322
    %v336 = vmul.f32 %v334, %v322
    %v337 = vadd.f32 %v335, 1e-05
    %v338 = vadd.f32 %v336, 1e-05
    %v339 = vrsqrt.pop %v337
    %v340 = vrsqrt.pop %v338
    %v341 = vmul.f32 %v325, %v339
    %v342 = vmul.f32 %v326, %v340
    %v343 = vlaneseq
    %v344 = vshrl.u32 %v343, 7
    %v345 = vsub.s32 3, %v344
    %v346 = vrot.slane %v23, %v345
    %v347 = vmul.f32 %v341, %v346
    %v348 = vmul.f32 %v342, %v346
    %v349 = vadd.f32 %v21, %v347
    %v350 = vadd.f32 %v22, %v348
    %v351 = vlaneseq
    %v352 = vshrl.u32 %v351, 7
    %v353 = vsub.s32 4, %v352
    %v354 = vrot.slane %v23, %v353
    %v355 = vadd.f32 %v349, %v354
    %v356 = vadd.f32 %v350, %v354
    %v357 = vld [vmem:[%s2] sm:$0xff]
    %v358 = vld [vmem:[%s2 + $0x8] sm:$0xff]
    %v359 = vld [vmem:[%s2 + $0x10] sm:$0xff]
    %v360 = vld [vmem:[%s2 + $0x18] sm:$0xff]
    %v361 = vlaneseq
    %v362 = vshrl.u32 %v361, 7
    %v363 = vsub.s32 0, %v362
    %v364 = vrot.slane %v23, %v363
    %v366 = vsel %vm32, %v355, 0
    %v369 = vsel %vm32, %v356, 0
    %371 = vmatprep.subr.mxu0 0.0
    %372 = vmatpush1.msra.mxu0 %v357
    %373 = vmatprep.subr.mxu0 0.0
    %374 = vmatpush1.msra.mxu0 %v358
    %375 = vmatprep.subr.mxu0 0.0
    %376 = vmatpush1.msra.mxu0 %v359
    %377 = vmatprep.subr.mxu0 0.0
    %378 = vmatpush1.msra.mxu0 %v360
    %379 = vmatprep.subr.mxu0 0.0
    %380 = vmatpush1.msra.mxu0 0.0
    %381 = vmatprep.subr.mxu0 0.0
    %382 = vmatpush1.msra.mxu0 0.0
    %383 = vmatprep.subr.mxu0 0.0
    %384 = vmatpush1.msra.mxu0 0.0
    %385 = vmatprep.subr.mxu0 0.0
    %386 = vmatpush1.msra.mxu0 0.0
    %387 = vmatprep.subr.mxu0 0.0
    %388 = vmatpush1.msra.mxu0 0.0
    %389 = vmatprep.subr.mxu0 0.0
    %390 = vmatpush1.msra.mxu0 0.0
    %391 = vmatprep.subr.mxu0 0.0
    %392 = vmatpush1.msra.mxu0 0.0
    %393 = vmatprep.subr.mxu0 0.0
    %394 = vmatpush1.msra.mxu0 0.0
    %395 = vmatprep.subr.mxu0 0.0
    %396 = vmatpush1.msra.mxu0 0.0
    %397 = vmatprep.subr.mxu0 0.0
    %398 = vmatpush1.msra.mxu0 0.0
    %399 = vmatprep.subr.mxu0 0.0
    %400 = vmatpush1.msra.mxu0 0.0
    %401 = vmatprep.subr.mxu0 0.0
    %402 = vmatpush1.msra.mxu0 0.0
    %403 = vmatprep.subr.mxu0 0.0
    %404 = vmatpush1.msra.mxu0 0.0
    %405 = vmatprep.subr.mxu0 0.0
    %406 = vmatpush1.msra.mxu0 0.0
    %407 = vmatprep.subr.mxu0 0.0
    %408 = vmatpush1.msra.mxu0 0.0
    %409 = vmatprep.subr.mxu0 0.0
    %410 = vmatpush1.msra.mxu0 0.0
    %411 = vmatprep.subr.mxu0 0.0
    %412 = vmatpush1.msra.mxu0 0.0
    %413 = vmatprep.subr.mxu0 0.0
    %414 = vmatpush1.msra.mxu0 0.0
    %415 = vmatprep.subr.mxu0 0.0
    %416 = vmatpush1.msra.mxu0 0.0
    %417 = vmatprep.subr.mxu0 0.0
    %418 = vmatpush1.msra.mxu0 0.0
    %419 = vmatprep.subr.mxu0 0.0
    %420 = vmatpush1.msra.mxu0 0.0
    %421 = vmatprep.subr.mxu0 0.0
    %422 = vmatpush1.msra.mxu0 0.0
    %423 = vmatprep.subr.mxu0 0.0
    %424 = vmatpush1.msra.mxu0 0.0
    %425 = vmatprep.subr.mxu0 0.0
    %426 = vmatpush1.msra.mxu0 0.0
    %427 = vmatprep.subr.mxu0 0.0
    %428 = vmatpush1.msra.mxu0 0.0
    %429 = vmatprep.subr.mxu0 0.0
    %430 = vmatpush1.msra.mxu0 0.0
    %431 = vmatprep.subr.mxu0 0.0
    %432 = vmatpush1.msra.mxu0 0.0
    %433 = vmatprep.subr.mxu0 0.0
    %434 = vmatpush1.msra.mxu0 0.0
    %435 = vmatprep.mubr.f32.mxu0 0.0
    %436 = vmatmul.mubr.f32.gmra.mrb[0].mxu0 %v366
    %v437 = vpop.f32.mrb[0].mxu0
    %v438 = vadd.f32 %v364, %v437
    %v439 = vpop.f32.mrb[0].mxu0
    %440 = vmatprep.mubr.f32.mxu0 0.0
    %441 = vmatmul.mubr.f32.gmra.mrb[0].mxu0 %v369
    %v442 = vpop.f32.mrb[0].mxu0
    %v443 = vadd.f32 %v364, %v442
    %v444 = vpop.f32.mrb[0].mxu0
    %445 = vdwg.mxu0
    %v446 = vmax.f32 %v438, 0.0
    %v447 = vmax.f32 %v443, 0.0
    %v448 = vld [vmem:[%s3] sm:$0xff]
    %v449 = vld [vmem:[%s3 + $0x8] sm:$0xff]
    %v450 = vld [vmem:[%s3 + $0x10] sm:$0xff]
    %v451 = vld [vmem:[%s3 + $0x18] sm:$0xff]
    %v452 = vld [vmem:[%s3 + $0x20] sm:$0xff]
    %v453 = vld [vmem:[%s3 + $0x28] sm:$0xff]
    %v454 = vld [vmem:[%s3 + $0x30] sm:$0xff]
    %v455 = vld [vmem:[%s3 + $0x38] sm:$0xff]
    %v456 = vld [vmem:[%s3 + $0x40] sm:$0xff]
    %v457 = vld [vmem:[%s3 + $0x48] sm:$0xff]
    %v458 = vld [vmem:[%s3 + $0x50] sm:$0xff]
    %v459 = vld [vmem:[%s3 + $0x58] sm:$0xff]
    %v460 = vld [vmem:[%s3 + $0x60] sm:$0xff]
    %v461 = vld [vmem:[%s3 + $0x68] sm:$0xff]
    %v462 = vld [vmem:[%s3 + $0x70] sm:$0xff]
    %v463 = vld [vmem:[%s3 + $0x78] sm:$0xff]
    %v464 = vlaneseq
    %v465 = vshrl.u32 %v464, 7
    %v466 = vsub.s32 2, %v465
    %v467 = vrot.slane %v23, %v466
    %468 = vmatprep.subr.mxu0 0.0
    %469 = vmatpush1.msra.mxu0 %v448
    %470 = vmatprep.subr.mxu0 0.0
    %471 = vmatpush1.msra.mxu0 %v449
    %472 = vmatprep.subr.mxu0 0.0
    %473 = vmatpush1.msra.mxu0 %v450
    %474 = vmatprep.subr.mxu0 0.0
    %475 = vmatpush1.msra.mxu0 %v451
    %476 = vmatprep.subr.mxu0 0.0
    %477 = vmatpush1.msra.mxu0 %v452
    %478 = vmatprep.subr.mxu0 0.0
    %479 = vmatpush1.msra.mxu0 %v453
    %480 = vmatprep.subr.mxu0 0.0
    %481 = vmatpush1.msra.mxu0 %v454
    %482 = vmatprep.subr.mxu0 0.0
    %483 = vmatpush1.msra.mxu0 %v455
    %484 = vmatprep.subr.mxu0 0.0
    %485 = vmatpush1.msra.mxu0 %v456
    %486 = vmatprep.subr.mxu0 0.0
    %487 = vmatpush1.msra.mxu0 %v457
    %488 = vmatprep.subr.mxu0 0.0
    %489 = vmatpush1.msra.mxu0 %v458
    %490 = vmatprep.subr.mxu0 0.0
    %491 = vmatpush1.msra.mxu0 %v459
    %492 = vmatprep.subr.mxu0 0.0
    %493 = vmatpush1.msra.mxu0 %v460
    %494 = vmatprep.subr.mxu0 0.0
    %495 = vmatpush1.msra.mxu0 %v461
    %496 = vmatprep.subr.mxu0 0.0
    %497 = vmatpush1.msra.mxu0 %v462
    %498 = vmatprep.subr.mxu0 0.0
    %499 = vmatpush1.msra.mxu0 %v463
    %500 = vmatprep.subr.mxu0 0.0
    %501 = vmatpush1.msra.mxu0 0.0
    %502 = vmatprep.subr.mxu0 0.0
    %503 = vmatpush1.msra.mxu0 0.0
    %504 = vmatprep.subr.mxu0 0.0
    %505 = vmatpush1.msra.mxu0 0.0
    %506 = vmatprep.subr.mxu0 0.0
    %507 = vmatpush1.msra.mxu0 0.0
    %508 = vmatprep.subr.mxu0 0.0
    %509 = vmatpush1.msra.mxu0 0.0
    %510 = vmatprep.subr.mxu0 0.0
    %511 = vmatpush1.msra.mxu0 0.0
    %512 = vmatprep.subr.mxu0 0.0
    %513 = vmatpush1.msra.mxu0 0.0
    %514 = vmatprep.subr.mxu0 0.0
    %515 = vmatpush1.msra.mxu0 0.0
    %516 = vmatprep.subr.mxu0 0.0
    %517 = vmatpush1.msra.mxu0 0.0
    %518 = vmatprep.subr.mxu0 0.0
    %519 = vmatpush1.msra.mxu0 0.0
    %520 = vmatprep.subr.mxu0 0.0
    %521 = vmatpush1.msra.mxu0 0.0
    %522 = vmatprep.subr.mxu0 0.0
    %523 = vmatpush1.msra.mxu0 0.0
    %524 = vmatprep.subr.mxu0 0.0
    %525 = vmatpush1.msra.mxu0 0.0
    %526 = vmatprep.subr.mxu0 0.0
    %527 = vmatpush1.msra.mxu0 0.0
    %528 = vmatprep.subr.mxu0 0.0
    %529 = vmatpush1.msra.mxu0 0.0
    %530 = vmatprep.subr.mxu0 0.0
    %531 = vmatpush1.msra.mxu0 0.0
    %532 = vmatprep.mubr.f32.mxu0 0.0
    %533 = vmatmul.mubr.f32.gmra.mrb[0].mxu0 %v446
    %v534 = vpop.f32.mrb[0].mxu0
    %v535 = vadd.f32 %v467, %v534
    %v536 = vpop.f32.mrb[0].mxu0
    %537 = vmatprep.mubr.f32.mxu0 0.0
    %538 = vmatmul.mubr.f32.gmra.mrb[0].mxu0 %v447
    %v539 = vpop.f32.mrb[0].mxu0
    %v540 = vadd.f32 %v467, %v539
    %v541 = vpop.f32.mrb[0].mxu0
    %542 = vdwg.mxu0
    %v543 = vsel %vm32, %v535, 0.0
    %544 = vadd.xlane.f32.xlu0 %v543
    %v545 = vpop.xlane.xlu0 %544
    %v546 = vsel %vm32, %v540, 0.0
    %547 = vadd.xlane.f32.xlu0 %v546
    %v548 = vpop.xlane.xlu0 %547
    %v549 = vmul.f32 %v545, %v322
    %v550 = vmul.f32 %v548, %v322
    %v551 = vsub.f32 %v535, %v549
    %v552 = vsub.f32 %v540, %v550
    %v553 = vmul.f32 %v551, %v551
    %v554 = vmul.f32 %v552, %v552
    %v555 = vsel %vm32, %v553, 0.0
    %556 = vadd.xlane.f32.xlu0 %v555
    %v557 = vpop.xlane.xlu0 %556
    %v558 = vsel %vm32, %v554, 0.0
    %559 = vadd.xlane.f32.xlu0 %v558
    %v560 = vpop.xlane.xlu0 %559
    %v561 = vmul.f32 %v557, %v322
    %v562 = vmul.f32 %v560, %v322
    %v563 = vadd.f32 %v561, 1e-05
    %v564 = vadd.f32 %v562, 1e-05
    %v565 = vrsqrt.pop %v563
    %v566 = vrsqrt.pop %v564
    %v567 = vmul.f32 %v551, %v565
    %v568 = vmul.f32 %v552, %v566
    %v569 = vlaneseq
    %v570 = vshrl.u32 %v569, 7
    %v571 = vsub.s32 5, %v570
    %v572 = vrot.slane %v23, %v571
    %v573 = vmul.f32 %v567, %v572
    %v574 = vmul.f32 %v568, %v572
    %v575 = vadd.f32 %v355, %v573
    %v576 = vadd.f32 %v356, %v574
    %v577 = vlaneseq
    %v578 = vshrl.u32 %v577, 7
    %v579 = vsub.s32 6, %v578
    %v580 = vrot.slane %v23, %v579
    %v581 = vadd.f32 %v575, %v580
    %v582 = vadd.f32 %v576, %v580
    %583 = vst.msk [vmem:[#allocation2] sm:$0xff] %vm32, %v581
    %584 = vst.msk [vmem:[#allocation2 + $0x8] sm:$0xff] %vm32, %v582
    // Predicated region
    $region22: #{tpu_custom_call.1} parent=1 // pred_check
      _
    $region23: #{tpu_custom_call.1} parent=1 // pred_check_branch
      %586 = sbr.rel (0) target = $region25
    $region24: #{tpu_custom_call.1} parent=1 // pred_region
      %s588 = ssub.s32 256, 256
      %589 = vsyncadd [#allocation3], %s588
      %s590 = sshll.u32 [#allocation2], 4
      %s591 = int_to_ptr.vmem [resolvable:$true] %s590
      %596 = dma.vmem_to_hbm [thread:$0]  %s591, 256, %s5, [#allocation3], 128, 128, 8
    $region25: #{tpu_custom_call.1} parent=1 // pred_fallthru
      _
    // Predicated region
    $region26: #{tpu_custom_call.1} parent=1 // pred_check
      _
    $region27: #{tpu_custom_call.1} parent=1 // pred_check_branch
      %598 = sbr.rel (0) target = $region29
    $region28: #{tpu_custom_call.1} parent=1 // pred_region
      %599 = dma.done [#allocation3], 256
    $region29: #{tpu_custom_call.1} parent=1 // pred_fallthru
      _
    %600 = vsyncpa [#allocation3], 1

</llo_original>
